<compile_context>
chip_gen: v5e
topology: v5e:2x2
jax: 0.10.0
libtpu: 0.0.40
codegen_flags: <defaults>
</compile_context>

<pallas_src>
import jax
import jax.numpy as jnp
from jax.experimental import pallas as pl
from jax.experimental.pallas import tpu as pltpu

# ----------------------------- config ---------------------------------------
CLASSIFICATION_TASKS = ["tox_a", "tox_b", "tox_c"]      # 3 classification tasks
REGRESSION_TASKS = ["ld50", "logp_tox"]                 # 2 regression tasks

CONFIG = {
    "atom_features_dim": 16,
    "hidden_dim": 32,
    "num_encoder_layers": 2,
    "num_attention_heads": 4,
    "dropout": 0.1,                       # inference: dropout is identity
    "use_hybrid_architecture": False,     # -> GCN main encoder
    "use_geometric_encoder": False,
    "use_hierarchical_encoder": False,
    "use_fingerprints": False,
    "use_contrastive_learning": False,
    "task_configs": {t: {"type": "classification"} for t in CLASSIFICATION_TASKS}
                  | {t: {"type": "regression"} for t in REGRESSION_TASKS},
}

HIDDEN_PAD = 128    # hidden dim padded to one full lane width
HEAD_PAD = 128      # fused cls+reg head padded to one full lane width


# ----------------------------- Pallas kernel --------------------------------
def _toxd4c_kernel(
    x_ref,        # (1, GN, F)         bf16 packed atom features (G graphs)
    a_ref,        # (1, GN, GN)        bf16 block-diagonal normalized adjacency
    pool_ref,     # (1, G, GN)         f32 block-diag masked mean-pool weights
    w_emb_ref,    # (F, HP)            bf16
    b_emb_ref,    # (1, HP)            f32
    w_gcn_ref,    # (L, HP, HP)        bf16
    b_gcn_ref,    # (L, HP)            f32
    w_head_ref,   # (HP, OP)           bf16  fused [cls | reg] head
    b_head_ref,   # (1, OP)            f32
    out_ref,      # (1, G, HP + OP)    f32  [graph_repr | head]
):
    f32 = jnp.float32
    bf16 = jnp.bfloat16

    x = x_ref[0]          # (GN, F)   bf16
    a = a_ref[0]          # (GN, GN)  bf16 block-diagonal

    # atom_embedding: Linear(F -> H), H zero-padded to HP lanes (bf16 x bf16 -> f32)
    h = jnp.dot(x, w_emb_ref[...], preferred_element_type=f32) + b_emb_ref[...]

    # main_encoder: GCN layers  h <- ReLU( A_norm @ h @ W_l + b_l )
    # (GCNConv: A_norm @ (h W) + b == (A_norm @ h) W + b)
    num_layers = w_gcn_ref.shape[0]
    for l in range(num_layers):
        h = jnp.dot(a, h.astype(bf16), preferred_element_type=f32)          # A @ h
        h = jnp.dot(h.astype(bf16), w_gcn_ref[l], preferred_element_type=f32)
        h = h + b_gcn_ref[pl.ds(l, 1), :]
        if l < num_layers - 1:
            h = jnp.maximum(h, 0.0)          # f32 elementwise (v5e-friendly)

    # global_mean_pool over valid atoms, batched over the G graphs of this tile
    g = jnp.dot(pool_ref[0], h, preferred_element_type=f32)                 # (G, HP)

    # fusion_layer bypassed (single graph representation).
    # prediction_head: fused classification + regression heads, one M=G matmul.
    head = jnp.dot(g.astype(bf16), w_head_ref[...],
                   preferred_element_type=f32) + b_head_ref[...]            # (G, OP)

    # single lane-dense writeback: [graph_repr | head]
    out_ref[0] = jnp.concatenate([g, head], axis=-1)


# ----------------------------- wrapper ---------------------------------------
def toxd4c_forward(x, a_norm, pool_w, params_padded, *, hidden_dim,
                   num_cls, num_reg, graphs_per_tile=8):
    """x: (B, n_max, F) f32 (padded-atom rows zeroed), a_norm: (B, n_max, n_max)
    f32 normalized adjacency, pool_w: (B, n_max) f32 masked mean-pool weights."""
    B, n_max, F = x.shape
    G = graphs_per_tile              # 8 -> 128-row tiles (v5e); 16 -> 256 (v6e/v7x)
    HP = params_padded["w_emb"].shape[1]
    OP = params_padded["w_head"].shape[1]
    L = params_padded["w_gcn"].shape[0]

    # pad batch to a multiple of G with dummy graphs (zero adjacency / pool)
    Bp = ((B + G - 1) // G) * G
    pad = Bp - B
    if pad:
        x = jnp.pad(x, ((0, pad), (0, 0), (0, 0)))
        a_norm = jnp.pad(a_norm, ((0, pad), (0, 0), (0, 0)))
        pool_w = jnp.pad(pool_w, ((0, pad), (0, 0)))
    T = Bp // G
    GN = G * n_max

    # pack G graphs per tile: flattened features + block-diag adjacency / pooling
    x_p = x.reshape(T, GN, F).astype(jnp.bfloat16)
    a4 = a_norm.reshape(T, G, n_max, n_max).astype(jnp.bfloat16)
    p4 = pool_w.reshape(T, G, n_max).astype(jnp.float32)
    a_bd = jnp.zeros((T, GN, GN), jnp.bfloat16)
    pool_bd = jnp.zeros((T, G, GN), jnp.float32)
    for g in range(G):
        lo, hi = g * n_max, (g + 1) * n_max
        a_bd = a_bd.at[:, lo:hi, lo:hi].set(a4[:, g])
        pool_bd = pool_bd.at[:, g, lo:hi].set(p4[:, g])

    per_tile3 = lambda t: (t, 0, 0)
    const2 = lambda t: (0, 0)
    const3 = lambda t: (0, 0, 0)

    flops = T * (2 * GN * F * HP
                 + L * (2 * GN * GN * HP + 2 * GN * HP * HP)
                 + 2 * G * GN * HP
                 + 2 * G * HP * OP)
    bytes_accessed = (int(x_p.size) * 2 + int(a_bd.size) * 2 + int(pool_bd.size) * 4
                      + sum(int(v.size) * int(v.dtype.itemsize)
                            for v in params_padded.values())
                      + T * G * (HP + OP) * 4)

    out = pl.pallas_call(
        _toxd4c_kernel,
        grid=(T,),
        in_specs=[
            pl.BlockSpec((1, GN, F), per_tile3),
            pl.BlockSpec((1, GN, GN), per_tile3),
            pl.BlockSpec((1, G, GN), per_tile3),
            pl.BlockSpec((F, HP), const2),
            pl.BlockSpec((1, HP), const2),
            pl.BlockSpec((L, HP, HP), const3),
            pl.BlockSpec((L, HP), const2),
            pl.BlockSpec((HP, OP), const2),
            pl.BlockSpec((1, OP), const2),
        ],
        out_specs=pl.BlockSpec((1, G, HP + OP), per_tile3),
        out_shape=jax.ShapeDtypeStruct((T, G, HP + OP), jnp.float32),
        compiler_params=pltpu.CompilerParams(
            dimension_semantics=("parallel",),        # shard tiles across TCs
            vmem_limit_bytes=8 * 1024 * 1024,         # working set << 1 MiB
        ),
        cost_estimate=pl.CostEstimate(
            flops=flops, transcendentals=0, bytes_accessed=bytes_accessed),
    )(x_p, a_bd, pool_bd,
      params_padded["w_emb"], params_padded["b_emb"],
      params_padded["w_gcn"], params_padded["b_gcn"],
      params_padded["w_head"], params_padded["b_head"])

    out = out.reshape(Bp, HP + OP)[:B]
    graph_repr = out[:, :hidden_dim]
    head = out[:, HP:HP + num_cls + num_reg]
    return {
        "predictions": {"classification": head[:, :num_cls],
                        "regression": head[:, num_cls:]},
        "graph_representation": graph_repr,
        "uncertainties": None,
    }


# ----------------------------- plain-JAX glue --------------------------------
def build_normalized_adjacency(edge_index, n_valid, n_max):
    """Per-graph D^-1/2 (A + I) D^-1/2, zero-padded to (n_max, n_max)."""
    src, dst = edge_index
    a = jnp.zeros((n_max, n_max), jnp.float32)
    a = a.at[src, dst].set(1.0)
    a = a.at[dst, src].set(1.0)            # undirected
    valid = (jnp.arange(n_max) < n_valid).astype(jnp.float32)
    a = jnp.maximum(a, jnp.diag(valid))    # self-loops only on valid nodes
    deg = jnp.sum(a, axis=1)
    d_inv_sqrt = jnp.where(deg > 0, 1.0 / jnp.sqrt(deg), 0.0)
    return a * d_inv_sqrt[:, None] * d_inv_sqrt[None, :]


def build_pool_weights(n_valid, n_max):
    """(n_max,) masked mean-pool weights (works with static or traced n_valid)."""
    valid = (jnp.arange(n_max) < n_valid).astype(jnp.float32)
    return valid / jnp.maximum(valid.sum(), 1.0)


def init_params(key, cfg):
    F = cfg["atom_features_dim"]
    H = cfg["hidden_dim"]
    L = cfg["num_encoder_layers"]
    C = len(CLASSIFICATION_TASKS)
    R = len(REGRESSION_TASKS)
    ks = jax.random.split(key, 4)
    return {
        "w_emb": 0.1 * jax.random.normal(ks[0], (F, H), jnp.float32),
        "b_emb": jnp.zeros((1, H), jnp.float32),
        "w_gcn": 0.1 * jax.random.normal(ks[1], (L, H, H), jnp.float32),
        "b_gcn": jnp.zeros((L, H), jnp.float32),
        "w_cls": 0.1 * jax.random.normal(ks[2], (H, C), jnp.float32),
        "b_cls": jnp.zeros((1, C), jnp.float32),
        "w_reg": 0.1 * jax.random.normal(ks[3], (H, R), jnp.float32),
        "b_reg": jnp.zeros((1, R), jnp.float32),
    }


def pad_params(params, hidden_pad, head_pad):
    """Zero-pad hidden dim to `hidden_pad` lanes, fuse cls+reg heads into one
    lane-dense weight, and cast matmul weights to bf16 (biases stay f32).
    Zero padding keeps the valid slice numerically identical."""
    F, H = params["w_emb"].shape
    L = params["w_gcn"].shape[0]

    def pad2(a, rows, cols):
        out = jnp.zeros((rows, cols), a.dtype)
        return out.at[:a.shape[0], :a.shape[1]].set(a)

    w_gcn_p = jnp.zeros((L, hidden_pad, hidden_pad), jnp.float32)
    w_gcn_p = w_gcn_p.at[:, :H, :H].set(params["w_gcn"])
    b_gcn_p = jnp.zeros((L, hidden_pad), jnp.float32).at[:, :H].set(params["b_gcn"])

    w_head = jnp.concatenate([params["w_cls"], params["w_reg"]], axis=1)  # (H, C+R)
    b_head = jnp.concatenate([params["b_cls"], params["b_reg"]], axis=1)  # (1, C+R)

    return {
        "w_emb": pad2(params["w_emb"], F, hidden_pad).astype(jnp.bfloat16),
        "b_emb": pad2(params["b_emb"], 1, hidden_pad),
        "w_gcn": w_gcn_p.astype(jnp.bfloat16),
        "b_gcn": b_gcn_p,
        "w_head": pad2(w_head, hidden_pad, head_pad).astype(jnp.bfloat16),
        "b_head": pad2(b_head, 1, head_pad),
    }


def toxd4c_reference(x, a_norm, pool_w, params_padded, num_layers):
    """Pure-JAX per-graph reference mirroring the kernel math (bf16 operands,
    f32 accumulation).  The kernel's block-diagonal packing is mathematically
    identical per graph because off-diagonal blocks are exact zeros."""
    f32, bf16 = jnp.float32, jnp.bfloat16
    pp = params_padded

    def per_graph(xg, ag, pg):
        xg = xg.astype(bf16)
        ag = ag.astype(bf16)
        h = jnp.dot(xg, pp["w_emb"], preferred_element_type=f32) + pp["b_emb"]
        for l in range(num_layers):
            h = jnp.dot(ag, h.astype(bf16), preferred_element_type=f32)
            h = jnp.dot(h.astype(bf16), pp["w_gcn"][l], preferred_element_type=f32)
            h = h + pp["b_gcn"][l][None, :]
            if l < num_layers - 1:
                h = jnp.maximum(h, 0.0)
        g = jnp.dot(pg[None, :], h, preferred_element_type=f32)          # (1, HP)
        head = jnp.dot(g.astype(bf16), pp["w_head"],
                       preferred_element_type=f32) + pp["b_head"]        # (1, OP)
        return g[0], head[0]

    return jax.vmap(per_graph)(x, a_norm, pool_w)


if __name__ == "__main__":
    key = jax.random.PRNGKey(0)
    k_x, k_p = jax.random.split(key)

    cfg = CONFIG
    B = 16           # graphs in the batch
    n_max = 16       # padded atoms per graph
    G = 8            # graphs per tile -> 128-row MXU tiles (use 16 on v6e/v7x)
    F = cfg["atom_features_dim"]
    H = cfg["hidden_dim"]
    C = len(CLASSIFICATION_TASKS)
    R = len(REGRESSION_TASKS)

    # Variable-size chain graphs, zero-padded to n_max atoms each.
    n_valids = [n_max - (i % 4) for i in range(B)]
    x = jax.random.normal(k_x, (B, n_max, F), jnp.float32)

    a_list, pool_list, mask_list = [], [], []
    for i in range(B):
        n_i = n_valids[i]
        src = jnp.arange(n_i - 1, dtype=jnp.int32)
        dst = src + 1
        a_list.append(build_normalized_adjacency((src, dst), n_i, n_max))
        pool_list.append(build_pool_weights(n_i, n_max))
        mask_list.append((jnp.arange(n_max) < n_i).astype(jnp.float32))

    a_norm = jnp.stack(a_list)                      # (B, n_max, n_max)
    pool_w = jnp.stack(pool_list)                   # (B, n_max)
    x = x * jnp.stack(mask_list)[:, :, None]        # zero padded atom rows

    params = init_params(k_p, cfg)
    params_padded = pad_params(params, HIDDEN_PAD, HEAD_PAD)

    out = toxd4c_forward(x, a_norm, pool_w, params_padded,
                         hidden_dim=H, num_cls=C, num_reg=R, graphs_per_tile=G)
    jax.block_until_ready(out)

    assert out["graph_representation"].shape == (B, H)
    assert out["predictions"]["classification"].shape == (B, C)
    assert out["predictions"]["regression"].shape == (B, R)

    # Correctness check against a pure-JAX reference of the same math.
    g_ref, head_ref = toxd4c_reference(x, a_norm, pool_w, params_padded,
                                       cfg["num_encoder_layers"])
    assert jnp.allclose(out["graph_representation"], g_ref[:, :H],
                        atol=1e-2, rtol=1e-2)
    assert jnp.allclose(out["predictions"]["classification"], head_ref[:, :C],
                        atol=1e-2, rtol=1e-2)
    assert jnp.allclose(out["predictions"]["regression"], head_ref[:, C:C + R],
                        atol=1e-2, rtol=1e-2)
    assert bool(jnp.all(jnp.isfinite(out["graph_representation"])))

    print("KERNEL_OK")
</pallas_src>

<mosaic_0001>
module attributes {stable_mosaic.version = 11 : i64} {
  func.func @_toxd4c_kernel(%arg0: i32, %arg1: memref<1x128x16xbf16, #tpu.memory_space<vmem>>, %arg2: memref<1x128x128xbf16, #tpu.memory_space<vmem>>, %arg3: memref<1x8x128xf32, #tpu.memory_space<vmem>>, %arg4: memref<16x128xbf16, #tpu.memory_space<vmem>>, %arg5: memref<1x128xf32, #tpu.memory_space<vmem>>, %arg6: memref<2x128x128xbf16, #tpu.memory_space<vmem>>, %arg7: memref<2x128xf32, #tpu.memory_space<vmem>>, %arg8: memref<128x128xbf16, #tpu.memory_space<vmem>>, %arg9: memref<1x128xf32, #tpu.memory_space<vmem>>, %arg10: memref<1x8x256xf32, #tpu.memory_space<vmem>>) attributes {dimension_semantics = [#tpu.dimension_semantics<parallel>], iteration_bounds = array<i64: 2>, scalar_prefetch = 0 : i64, scratch_operands = 0 : i64, tpu.core_type = #tpu.core_type<tc>, window_params = [{transform_indices = @transform_0, window_bounds = array<i64: 1, 128, 16>}, {transform_indices = @transform_1, window_bounds = array<i64: 1, 128, 128>}, {transform_indices = @transform_2, window_bounds = array<i64: 1, 8, 128>}, {pipeline_mode = #tpu.pipeline_mode<synchronous>, transform_indices = @transform_3, window_bounds = array<i64: 16, 128>}, {pipeline_mode = #tpu.pipeline_mode<synchronous>, transform_indices = @transform_4, window_bounds = array<i64: 1, 128>}, {pipeline_mode = #tpu.pipeline_mode<synchronous>, transform_indices = @transform_5, window_bounds = array<i64: 2, 128, 128>}, {pipeline_mode = #tpu.pipeline_mode<synchronous>, transform_indices = @transform_6, window_bounds = array<i64: 2, 128>}, {pipeline_mode = #tpu.pipeline_mode<synchronous>, transform_indices = @transform_7, window_bounds = array<i64: 128, 128>}, {pipeline_mode = #tpu.pipeline_mode<synchronous>, transform_indices = @transform_8, window_bounds = array<i64: 1, 128>}, {transform_indices = @transform_9, window_bounds = array<i64: 1, 8, 256>}]} {
    %c0 = arith.constant 0 : index
    %c0_0 = arith.constant 0 : index
    %c0_1 = arith.constant 0 : index
    %0 = vector.load %arg1[%c0, %c0_0, %c0_1] : memref<1x128x16xbf16, #tpu.memory_space<vmem>>, vector<1x128x16xbf16>
    %1 = vector.shape_cast %0 : vector<1x128x16xbf16> to vector<128x16xbf16>
    %c0_2 = arith.constant 0 : index
    %c0_3 = arith.constant 0 : index
    %c0_4 = arith.constant 0 : index
    %2 = vector.load %arg2[%c0_2, %c0_3, %c0_4] : memref<1x128x128xbf16, #tpu.memory_space<vmem>>, vector<1x128x128xbf16>
    %3 = vector.shape_cast %2 : vector<1x128x128xbf16> to vector<128x128xbf16>
    %c0_5 = arith.constant 0 : index
    %c0_6 = arith.constant 0 : index
    %4 = vector.load %arg4[%c0_5, %c0_6] : memref<16x128xbf16, #tpu.memory_space<vmem>>, vector<16x128xbf16>
    %cst = arith.constant dense<0.000000e+00> : vector<128x128xf32>
    %5 = tpu.matmul %1, %4, %cst {dimension_numbers = #tpu.dot_dimension_numbers<[1], [0], [0], [1], [0, 0, 1, 1], [], []>} : vector<128x16xbf16>, vector<16x128xbf16>, vector<128x128xf32> -> vector<128x128xf32>
    %c0_7 = arith.constant 0 : index
    %c0_8 = arith.constant 0 : index
    %6 = vector.load %arg5[%c0_7, %c0_8] : memref<1x128xf32, #tpu.memory_space<vmem>>, vector<1x128xf32>
    %7 = vector.broadcast %6 : vector<1x128xf32> to vector<128x128xf32>
    %8 = arith.addf %5, %7 : vector<128x128xf32>
    %9 = arith.truncf %8 : vector<128x128xf32> to vector<128x128xbf16>
    %cst_9 = arith.constant dense<0.000000e+00> : vector<128x128xf32>
    %10 = tpu.matmul %3, %9, %cst_9 {dimension_numbers = #tpu.dot_dimension_numbers<[1], [0], [0], [1], [0, 0, 1, 1], [], []>} : vector<128x128xbf16>, vector<128x128xbf16>, vector<128x128xf32> -> vector<128x128xf32>
    %11 = arith.truncf %10 : vector<128x128xf32> to vector<128x128xbf16>
    %c0_10 = arith.constant 0 : index
    %c0_11 = arith.constant 0 : index
    %c0_12 = arith.constant 0 : index
    %12 = vector.load %arg6[%c0_10, %c0_11, %c0_12] : memref<2x128x128xbf16, #tpu.memory_space<vmem>>, vector<1x128x128xbf16>
    %13 = vector.shape_cast %12 : vector<1x128x128xbf16> to vector<128x128xbf16>
    %cst_13 = arith.constant dense<0.000000e+00> : vector<128x128xf32>
    %14 = tpu.matmul %11, %13, %cst_13 {dimension_numbers = #tpu.dot_dimension_numbers<[1], [0], [0], [1], [0, 0, 1, 1], [], []>} : vector<128x128xbf16>, vector<128x128xbf16>, vector<128x128xf32> -> vector<128x128xf32>
    %c0_14 = arith.constant 0 : index
    %c0_15 = arith.constant 0 : index
    %15 = vector.load %arg7[%c0_14, %c0_15] : memref<2x128xf32, #tpu.memory_space<vmem>>, vector<1x128xf32>
    %16 = vector.broadcast %15 : vector<1x128xf32> to vector<128x128xf32>
    %17 = arith.addf %14, %16 : vector<128x128xf32>
    %cst_16 = arith.constant 0.000000e+00 : f32
    %18 = vector.broadcast %cst_16 : f32 to vector<128x128xf32>
    %19 = arith.maximumf %17, %18 : vector<128x128xf32>
    %20 = arith.truncf %19 : vector<128x128xf32> to vector<128x128xbf16>
    %cst_17 = arith.constant dense<0.000000e+00> : vector<128x128xf32>
    %21 = tpu.matmul %3, %20, %cst_17 {dimension_numbers = #tpu.dot_dimension_numbers<[1], [0], [0], [1], [0, 0, 1, 1], [], []>} : vector<128x128xbf16>, vector<128x128xbf16>, vector<128x128xf32> -> vector<128x128xf32>
    %22 = arith.truncf %21 : vector<128x128xf32> to vector<128x128xbf16>
    %c1 = arith.constant 1 : index
    %c0_18 = arith.constant 0 : index
    %c0_19 = arith.constant 0 : index
    %23 = vector.load %arg6[%c1, %c0_18, %c0_19] : memref<2x128x128xbf16, #tpu.memory_space<vmem>>, vector<1x128x128xbf16>
    %24 = vector.shape_cast %23 : vector<1x128x128xbf16> to vector<128x128xbf16>
    %cst_20 = arith.constant dense<0.000000e+00> : vector<128x128xf32>
    %25 = tpu.matmul %22, %24, %cst_20 {dimension_numbers = #tpu.dot_dimension_numbers<[1], [0], [0], [1], [0, 0, 1, 1], [], []>} : vector<128x128xbf16>, vector<128x128xbf16>, vector<128x128xf32> -> vector<128x128xf32>
    %c1_21 = arith.constant 1 : index
    %c0_22 = arith.constant 0 : index
    %26 = vector.load %arg7[%c1_21, %c0_22] : memref<2x128xf32, #tpu.memory_space<vmem>>, vector<1x128xf32>
    %27 = vector.broadcast %26 : vector<1x128xf32> to vector<128x128xf32>
    %28 = arith.addf %25, %27 : vector<128x128xf32>
    %c0_23 = arith.constant 0 : index
    %c0_24 = arith.constant 0 : index
    %c0_25 = arith.constant 0 : index
    %29 = vector.load %arg3[%c0_23, %c0_24, %c0_25] : memref<1x8x128xf32, #tpu.memory_space<vmem>>, vector<1x8x128xf32>
    %30 = vector.shape_cast %29 : vector<1x8x128xf32> to vector<8x128xf32>
    %cst_26 = arith.constant dense<0.000000e+00> : vector<8x128xf32>
    %31 = tpu.matmul %30, %28, %cst_26 {dimension_numbers = #tpu.dot_dimension_numbers<[1], [0], [0], [1], [0, 0, 1, 1], [], []>} : vector<8x128xf32>, vector<128x128xf32>, vector<8x128xf32> -> vector<8x128xf32>
    %32 = arith.truncf %31 : vector<8x128xf32> to vector<8x128xbf16>
    %c0_27 = arith.constant 0 : index
    %c0_28 = arith.constant 0 : index
    %33 = vector.load %arg8[%c0_27, %c0_28] : memref<128x128xbf16, #tpu.memory_space<vmem>>, vector<128x128xbf16>
    %cst_29 = arith.constant dense<0.000000e+00> : vector<8x128xf32>
    %34 = tpu.matmul %32, %33, %cst_29 {dimension_numbers = #tpu.dot_dimension_numbers<[1], [0], [0], [1], [0, 0, 1, 1], [], []>} : vector<8x128xbf16>, vector<128x128xbf16>, vector<8x128xf32> -> vector<8x128xf32>
    %c0_30 = arith.constant 0 : index
    %c0_31 = arith.constant 0 : index
    %35 = vector.load %arg9[%c0_30, %c0_31] : memref<1x128xf32, #tpu.memory_space<vmem>>, vector<1x128xf32>
    %36 = vector.broadcast %35 : vector<1x128xf32> to vector<8x128xf32>
    %37 = arith.addf %34, %36 : vector<8x128xf32>
    %38 = tpu.concatenate %31, %37 in 1 : vector<8x128xf32>, vector<8x128xf32> -> vector<8x256xf32>
    %c0_32 = arith.constant 0 : index
    %c0_33 = arith.constant 0 : index
    %c0_34 = arith.constant 0 : index
    %39 = vector.load %arg10[%c0_32, %c0_33, %c0_34] : memref<1x8x256xf32, #tpu.memory_space<vmem>>, vector<1x8x256xf32>
    %40 = vector.shape_cast %39 : vector<1x8x256xf32> to vector<8x256xf32>
    %41 = vector.shape_cast %38 : vector<8x256xf32> to vector<1x8x256xf32>
    tpu.vector_store %arg10[%c0_32, %c0_33, %c0_34], %41 {strides = array<i32>} : memref<1x8x256xf32, #tpu.memory_space<vmem>>, vector<1x8x256xf32>,
    return
  }
  func.func @transform_0(%arg0: i32) -> (i32, i32, i32) {
    %c0_i32 = arith.constant 0 : i32
    %c0_i32_0 = arith.constant 0 : i32
    %c0_i32_1 = arith.constant 0 : i32
    return %arg0, %c0_i32, %c0_i32_0 : i32, i32, i32
  }
  func.func @transform_1(%arg0: i32) -> (i32, i32, i32) {
    %c0_i32 = arith.constant 0 : i32
    %c0_i32_0 = arith.constant 0 : i32
    %c0_i32_1 = arith.constant 0 : i32
    return %arg0, %c0_i32, %c0_i32_0 : i32, i32, i32
  }
  func.func @transform_2(%arg0: i32) -> (i32, i32, i32) {
    %c0_i32 = arith.constant 0 : i32
    %c0_i32_0 = arith.constant 0 : i32
    %c0_i32_1 = arith.constant 0 : i32
    return %arg0, %c0_i32, %c0_i32_0 : i32, i32, i32
  }
  func.func @transform_3(%arg0: i32) -> (i32, i32) {
    %c0_i32 = arith.constant 0 : i32
    %c0_i32_0 = arith.constant 0 : i32
    %c0_i32_1 = arith.constant 0 : i32
    return %c0_i32, %c0_i32_0 : i32, i32
  }
  func.func @transform_4(%arg0: i32) -> (i32, i32) {
    %c0_i32 = arith.constant 0 : i32
    %c0_i32_0 = arith.constant 0 : i32
    %c0_i32_1 = arith.constant 0 : i32
    return %c0_i32, %c0_i32_0 : i32, i32
  }
  func.func @transform_5(%arg0: i32) -> (i32, i32, i32) {
    %c0_i32 = arith.constant 0 : i32
    %c0_i32_0 = arith.constant 0 : i32
    %c0_i32_1 = arith.constant 0 : i32
    %c0_i32_2 = arith.constant 0 : i32
    return %c0_i32, %c0_i32_0, %c0_i32_1 : i32, i32, i32
  }
  func.func @transform_6(%arg0: i32) -> (i32, i32) {
    %c0_i32 = arith.constant 0 : i32
    %c0_i32_0 = arith.constant 0 : i32
    %c0_i32_1 = arith.constant 0 : i32
    return %c0_i32, %c0_i32_0 : i32, i32
  }
  func.func @transform_7(%arg0: i32) -> (i32, i32) {
    %c0_i32 = arith.constant 0 : i32
    %c0_i32_0 = arith.constant 0 : i32
    %c0_i32_1 = arith.constant 0 : i32
    return %c0_i32, %c0_i32_0 : i32, i32
  }
  func.func @transform_8(%arg0: i32) -> (i32, i32) {
    %c0_i32 = arith.constant 0 : i32
    %c0_i32_0 = arith.constant 0 : i32
    %c0_i32_1 = arith.constant 0 : i32
    return %c0_i32, %c0_i32_0 : i32, i32
  }
  func.func @transform_9(%arg0: i32) -> (i32, i32, i32) {
    %c0_i32 = arith.constant 0 : i32
    %c0_i32_0 = arith.constant 0 : i32
    %c0_i32_1 = arith.constant 0 : i32
    return %arg0, %c0_i32, %c0_i32_0 : i32, i32, i32
  }
}

</mosaic_0001>

<llo_original>
// kernel: tpu_custom_call.1
$region0: #{tpu_custom_call.1}
  #allocation0 [shape = 'u32[]', space=smem, size = 0x4, offset = 0x4, fixed_abs, tag = 'smem constant byte address 0x4 - core index']
  #allocation1 [shape = 'u32[72,128]{1,0:T(1,128)}', space=vmem, size = 0x9000, scoped, tag = 'internal scratch']
  %s0 = inlined_call_operand.vmem [shape: bf16[2,128,16], index: 0, kind: input, shape index: {}]
  %s1 = inlined_call_operand.vmem [shape: bf16[2,128,128], index: 1, kind: input, shape index: {}]
  %s2 = inlined_call_operand.vmem [shape: f32[2,8,128], index: 2, kind: input, shape index: {}]
  %s3 = inlined_call_operand.hbm [shape: bf16[16,128], index: 3, kind: input, shape index: {}]
  %s4 = inlined_call_operand.vmem [shape: f32[1,128], index: 4, kind: input, shape index: {}]
  %s5 = inlined_call_operand.hbm [shape: bf16[2,128,128], index: 5, kind: input, shape index: {}]
  %s6 = inlined_call_operand.vmem [shape: f32[2,128], index: 6, kind: input, shape index: {}]
  %s7 = inlined_call_operand.hbm [shape: bf16[128,128], index: 7, kind: input, shape index: {}]
  %s8 = inlined_call_operand.vmem [shape: f32[1,128], index: 8, kind: input, shape index: {}]
  %s9 = inlined_call_operand.hbm [shape: f32[2,8,256], index: 9, kind: output, shape index: {}]
  %s10 = sld [smem:[#allocation0]]
  $region81: #{tpu_custom_call.1} parent=0
    _
  %s12 = ssub.s32 1, %s10
  %s13 = scalar_select 0, %s12, %s10
  $region1: #{tpu_custom_call.1} parent=0
    #allocation2 [shape = 'u8[4096]{0}', space=vmem, size = 0x1000, scoped, tag = 'input window, operand 3, single buffered']
    #allocation3 [shape = 's32[2]{0}', space=sflag, size = 0x8, scoped, tag = 'scoped memory for tpu_custom_call.1']
    #allocation4 [shape = 's32[2]{0}', space=sflag, size = 0x8, scoped, tag = 'scoped memory for tpu_custom_call.1']
    #allocation5 [shape = 'u8[65536]{0}', space=vmem, size = 0x10000, scoped, tag = 'input window, operand 5, single buffered']
    #allocation6 [shape = 's32[1]{0}', space=sflag, size = 0x4, scoped, tag = 'scoped memory for tpu_custom_call.1']
    #allocation7 [shape = 'u8[32768]{0}', space=vmem, size = 0x8000, scoped, tag = 'input window, operand 7, single buffered']
    #allocation8 [shape = 'u8[16384]{0}', space=vmem, size = 0x4000, scoped, tag = 'output window, operand 0']
    %14 = vsyncpa [#allocation3], 0
    %15 = vsyncpa [#allocation6], 0
    %16 = vsyncpa [#allocation4], 0
    %s17 = scalar_lea.sflag [#allocation4], 1
    %18 = vsyncpa %s17, 0
    loop: start=0, step=1, limit=4
    $region2: #{tpu_custom_call.1} parent=1 // loop_pre_header
      _
    $region3: #{tpu_custom_call.1} parent=1 // loop_header
      %s20 = sphi 0, %s24
      %p21 = scmp.ge.s32.totalorder %s20, 4
      %s30 = sphi 0, %s32
      %s33 = sphi 0, %s30
      %s34 = sphi 0, %s33
      %s50 = sphi 0, %s34
      %s56 = sphi 0, %s58
      %s59 = sphi 0, %s56
      %s60 = sphi 0, %s59
      %s76 = sphi 0, %s60
      %s82 = sphi 0, %s84
      %s85 = sphi 0, %s82
      %s86 = sphi 0, %s85
      %s102 = sphi 0, %s86
      %s106 = sphi 0, %s106
      %s108 = sphi 0, %s106
      %s109 = sphi 0, %s108
      %s123 = sphi 0, %s109
      %s127 = sphi 0, %s127
      %s129 = sphi 0, %s127
      %s130 = sphi 0, %s129
      %s144 = sphi 0, %s130
      %s148 = sphi 0, %s148
      %s150 = sphi 0, %s148
      %s151 = sphi 0, %s150
      %s165 = sphi 0, %s151
      %s169 = sphi 0, %s169
      %s171 = sphi 0, %s169
      %s172 = sphi 0, %s171
      %s186 = sphi 0, %s172
      %s190 = sphi 0, %s190
      %s192 = sphi 0, %s190
      %s193 = sphi 0, %s192
      %s207 = sphi 0, %s193
      %s211 = sphi 0, %s211
      %s213 = sphi 0, %s211
      %s214 = sphi 0, %s213
      %s228 = sphi 0, %s214
      %s234 = sphi 0, %s236
      %s237 = sphi 0, %s234
      %s238 = sphi 0, %s237
      %s254 = sphi 0, %s238
    $region4: #{tpu_custom_call.1} parent=1 // loop_header_branch
      %23 = sbr.rel (%p21) target = $region8
    $region5: #{tpu_custom_call.1} parent=1 // loop_body
      %s25 = ssub.s32 %s20, 1
      %s26 = ssub.s32 %s20, 2
      %s27 = sadd.s32 %s20, 1
      %s28 = ssub.s32 %s20, %s27
      %p29 = scmp.eq.s32.totalorder %s28, 0
      %s31 = sadd.s32 %s30, 1
      %s32 = scalar_select %p29, %s30, %s31
      %p35 = pneg %p29
      %p36 = scmp.eq.s32.totalorder %s20, 1
      %p37 = por %p35, %p36
      %p38 = scmp.ne.s32.totalorder %s30, %s33
      %p39 = scmp.eq.s32.totalorder %s20, 0
      %p40 = por %p38, %p39
      %p41 = scmp.ne.s32.totalorder %s30, %s33
      %p42 = scmp.eq.s32.totalorder %s25, 1
      %p43 = por %p41, %p42
      %p44 = scmp.ne.s32.totalorder %s33, %s34
      %p45 = scmp.eq.s32.totalorder %s25, 0
      %p46 = por %p44, %p45
      %p47 = scmp.ne.s32.totalorder %s33, %s34
      %p48 = scmp.eq.s32.totalorder %s26, 1
      %p49 = por %p47, %p48
      %p51 = scmp.ne.s32.totalorder %s34, %s50
      %p52 = scmp.eq.s32.totalorder %s26, 0
      %p53 = por %p51, %p52
      %s54 = ssub.s32 %s20, %s27
      %p55 = scmp.eq.s32.totalorder %s54, 0
      %s57 = sadd.s32 %s56, 1
      %s58 = scalar_select %p55, %s56, %s57
      %p61 = pneg %p55
      %p62 = scmp.eq.s32.totalorder %s20, 1
      %p63 = por %p61, %p62
      %p64 = scmp.ne.s32.totalorder %s56, %s59
      %p65 = scmp.eq.s32.totalorder %s20, 0
      %p66 = por %p64, %p65
      %p67 = scmp.ne.s32.totalorder %s56, %s59
      %p68 = scmp.eq.s32.totalorder %s25, 1
      %p69 = por %p67, %p68
      %p70 = scmp.ne.s32.totalorder %s59, %s60
      %p71 = scmp.eq.s32.totalorder %s25, 0
      %p72 = por %p70, %p71
      %p73 = scmp.ne.s32.totalorder %s59, %s60
      %p74 = scmp.eq.s32.totalorder %s26, 1
      %p75 = por %p73, %p74
      %p77 = scmp.ne.s32.totalorder %s60, %s76
      %p78 = scmp.eq.s32.totalorder %s26, 0
      %p79 = por %p77, %p78
      %s80 = ssub.s32 %s20, %s27
      %p81 = scmp.eq.s32.totalorder %s80, 0
      %s83 = sadd.s32 %s82, 1
      %s84 = scalar_select %p81, %s82, %s83
      %p87 = pneg %p81
      %p88 = scmp.eq.s32.totalorder %s20, 1
      %p89 = por %p87, %p88
      %p90 = scmp.ne.s32.totalorder %s82, %s85
      %p91 = scmp.eq.s32.totalorder %s20, 0
      %p92 = por %p90, %p91
      %p93 = scmp.ne.s32.totalorder %s82, %s85
      %p94 = scmp.eq.s32.totalorder %s25, 1
      %p95 = por %p93, %p94
      %p96 = scmp.ne.s32.totalorder %s85, %s86
      %p97 = scmp.eq.s32.totalorder %s25, 0
      %p98 = por %p96, %p97
      %p99 = scmp.ne.s32.totalorder %s85, %s86
      %p100 = scmp.eq.s32.totalorder %s26, 1
      %p101 = por %p99, %p100
      %p103 = scmp.ne.s32.totalorder %s86, %s102
      %p104 = scmp.eq.s32.totalorder %s26, 0
      %p105 = por %p103, %p104
      %s107 = sadd.s32 %s106, 1
      %p110 = scmp.eq.s32.totalorder %s20, 1
      %p111 = scmp.ne.s32.totalorder %s106, %s108
      %p112 = scmp.eq.s32.totalorder %s20, 0
      %p113 = por %p111, %p112
      %p114 = scmp.ne.s32.totalorder %s106, %s108
      %p115 = scmp.eq.s32.totalorder %s25, 1
      %p116 = por %p114, %p115
      %p117 = scmp.ne.s32.totalorder %s108, %s109
      %p118 = scmp.eq.s32.totalorder %s25, 0
      %p119 = por %p117, %p118
      %p120 = scmp.ne.s32.totalorder %s108, %s109
      %p121 = scmp.eq.s32.totalorder %s26, 1
      %p122 = por %p120, %p121
      %p124 = scmp.ne.s32.totalorder %s109, %s123
      %p125 = scmp.eq.s32.totalorder %s26, 0
      %p126 = por %p124, %p125
      %s128 = sadd.s32 %s127, 1
      %p131 = scmp.eq.s32.totalorder %s20, 1
      %p132 = scmp.ne.s32.totalorder %s127, %s129
      %p133 = scmp.eq.s32.totalorder %s20, 0
      %p134 = por %p132, %p133
      %p135 = scmp.ne.s32.totalorder %s127, %s129
      %p136 = scmp.eq.s32.totalorder %s25, 1
      %p137 = por %p135, %p136
      %p138 = scmp.ne.s32.totalorder %s129, %s130
      %p139 = scmp.eq.s32.totalorder %s25, 0
      %p140 = por %p138, %p139
      %p141 = scmp.ne.s32.totalorder %s129, %s130
      %p142 = scmp.eq.s32.totalorder %s26, 1
      %p143 = por %p141, %p142
      %p145 = scmp.ne.s32.totalorder %s130, %s144
      %p146 = scmp.eq.s32.totalorder %s26, 0
      %p147 = por %p145, %p146
      %s149 = sadd.s32 %s148, 1
      %p152 = scmp.eq.s32.totalorder %s20, 1
      %p153 = scmp.ne.s32.totalorder %s148, %s150
      %p154 = scmp.eq.s32.totalorder %s20, 0
      %p155 = por %p153, %p154
      %p156 = scmp.ne.s32.totalorder %s148, %s150
      %p157 = scmp.eq.s32.totalorder %s25, 1
      %p158 = por %p156, %p157
      %p159 = scmp.ne.s32.totalorder %s150, %s151
      %p160 = scmp.eq.s32.totalorder %s25, 0
      %p161 = por %p159, %p160
      %p162 = scmp.ne.s32.totalorder %s150, %s151
      %p163 = scmp.eq.s32.totalorder %s26, 1
      %p164 = por %p162, %p163
      %p166 = scmp.ne.s32.totalorder %s151, %s165
      %p167 = scmp.eq.s32.totalorder %s26, 0
      %p168 = por %p166, %p167
      %s170 = sadd.s32 %s169, 1
      %p173 = scmp.eq.s32.totalorder %s20, 1
      %p174 = scmp.ne.s32.totalorder %s169, %s171
      %p175 = scmp.eq.s32.totalorder %s20, 0
      %p176 = por %p174, %p175
      %p177 = scmp.ne.s32.totalorder %s169, %s171
      %p178 = scmp.eq.s32.totalorder %s25, 1
      %p179 = por %p177, %p178
      %p180 = scmp.ne.s32.totalorder %s171, %s172
      %p181 = scmp.eq.s32.totalorder %s25, 0
      %p182 = por %p180, %p181
      %p183 = scmp.ne.s32.totalorder %s171, %s172
      %p184 = scmp.eq.s32.totalorder %s26, 1
      %p185 = por %p183, %p184
      %p187 = scmp.ne.s32.totalorder %s172, %s186
      %p188 = scmp.eq.s32.totalorder %s26, 0
      %p189 = por %p187, %p188
      %s191 = sadd.s32 %s190, 1
      %p194 = scmp.eq.s32.totalorder %s20, 1
      %p195 = scmp.ne.s32.totalorder %s190, %s192
      %p196 = scmp.eq.s32.totalorder %s20, 0
      %p197 = por %p195, %p196
      %p198 = scmp.ne.s32.totalorder %s190, %s192
      %p199 = scmp.eq.s32.totalorder %s25, 1
      %p200 = por %p198, %p199
      %p201 = scmp.ne.s32.totalorder %s192, %s193
      %p202 = scmp.eq.s32.totalorder %s25, 0
      %p203 = por %p201, %p202
      %p204 = scmp.ne.s32.totalorder %s192, %s193
      %p205 = scmp.eq.s32.totalorder %s26, 1
      %p206 = por %p204, %p205
      %p208 = scmp.ne.s32.totalorder %s193, %s207
      %p209 = scmp.eq.s32.totalorder %s26, 0
      %p210 = por %p208, %p209
      %s212 = sadd.s32 %s211, 1
      %p215 = scmp.eq.s32.totalorder %s20, 1
      %p216 = scmp.ne.s32.totalorder %s211, %s213
      %p217 = scmp.eq.s32.totalorder %s20, 0
      %p218 = por %p216, %p217
      %p219 = scmp.ne.s32.totalorder %s211, %s213
      %p220 = scmp.eq.s32.totalorder %s25, 1
      %p221 = por %p219, %p220
      %p222 = scmp.ne.s32.totalorder %s213, %s214
      %p223 = scmp.eq.s32.totalorder %s25, 0
      %p224 = por %p222, %p223
      %p225 = scmp.ne.s32.totalorder %s213, %s214
      %p226 = scmp.eq.s32.totalorder %s26, 1
      %p227 = por %p225, %p226
      %p229 = scmp.ne.s32.totalorder %s214, %s228
      %p230 = scmp.eq.s32.totalorder %s26, 0
      %p231 = por %p229, %p230
      %s232 = ssub.s32 %s20, %s27
      %p233 = scmp.eq.s32.totalorder %s232, 0
      %s235 = sadd.s32 %s234, 1
      %s236 = scalar_select %p233, %s234, %s235
      %p239 = pneg %p233
      %p240 = scmp.eq.s32.totalorder %s20, 1
      %p241 = por %p239, %p240
      %p242 = scmp.ne.s32.totalorder %s234, %s237
      %p243 = scmp.eq.s32.totalorder %s20, 0
      %p244 = por %p242, %p243
      %p245 = scmp.ne.s32.totalorder %s234, %s237
      %p246 = scmp.eq.s32.totalorder %s25, 1
      %p247 = por %p245, %p246
      %p248 = scmp.ne.s32.totalorder %s237, %s238
      %p249 = scmp.eq.s32.totalorder %s25, 0
      %p250 = por %p248, %p249
      %p251 = scmp.ne.s32.totalorder %s237, %s238
      %p252 = scmp.eq.s32.totalorder %s26, 1
      %p253 = por %p251, %p252
      %p255 = scmp.ne.s32.totalorder %s238, %s254
      %p256 = scmp.eq.s32.totalorder %s26, 0
      %p257 = por %p255, %p256
      %p258 = scmp.le.s32.totalorder 1, %s20
      %p259 = scmp.lt.s32.totalorder %s20, 3
      %p260 = pnand %p258, %p259
      %p261 = pneg %p260
      // Predicated region
      $region9: #{tpu_custom_call.1} parent=5 // pred_check
        _
      $region10: #{tpu_custom_call.1} parent=5 // pred_check_branch
        %263 = sbr.rel (%p260) target = $region12
      $region11: #{tpu_custom_call.1} parent=5 // pred_region
        %s264 = ssub.s32 %s20, 1
        // Predicated region
        $region13: #{tpu_custom_call.1} parent=11 // pred_check
          %p265 = pneg %p119
        $region14: #{tpu_custom_call.1} parent=11 // pred_check_branch
          %267 = sbr.rel (%p265) target = $region16
        $region15: #{tpu_custom_call.1} parent=11 // pred_region
          %269 = vsyncadd [#allocation3], 0
          %s270 = sshll.u32 %s3, 4
          %s271 = int_to_ptr.hbm [resolvable:$true] %s270
          %s272 = sshll.u32 [#allocation2], 4
          %s273 = int_to_ptr.vmem [resolvable:$true] %s272
          %278 = dma.hbm_to_vmem [thread:$0]  %s271, 128, %s273, [#allocation3], 64, 64, 4
        $region16: #{tpu_custom_call.1} parent=11 // pred_fallthru
          _
        // Predicated region
        $region17: #{tpu_custom_call.1} parent=11 // pred_check
          %p279 = pneg %p140
        $region18: #{tpu_custom_call.1} parent=11 // pred_check_branch
          %281 = sbr.rel (%p279) target = $region20
        $region19: #{tpu_custom_call.1} parent=11 // pred_region
          _
        $region20: #{tpu_custom_call.1} parent=11 // pred_fallthru
          _
        // Predicated region
        $region21: #{tpu_custom_call.1} parent=11 // pred_check
          %p282 = pneg %p161
        $region22: #{tpu_custom_call.1} parent=11 // pred_check_branch
          %284 = sbr.rel (%p282) target = $region24
        $region23: #{tpu_custom_call.1} parent=11 // pred_region
          %286 = vsyncadd [#allocation6], 0
          %s287 = sshll.u32 %s5, 4
          %s288 = int_to_ptr.hbm [resolvable:$true] %s287
          %s289 = sshll.u32 [#allocation5], 4
          %s290 = int_to_ptr.vmem [resolvable:$true] %s289
          %295 = dma.hbm_to_vmem [thread:$0]  %s288, 2048, %s290, [#allocation6], 64, 64, 4
        $region24: #{tpu_custom_call.1} parent=11 // pred_fallthru
          _
        // Predicated region
        $region25: #{tpu_custom_call.1} parent=11 // pred_check
          %p296 = pneg %p182
        $region26: #{tpu_custom_call.1} parent=11 // pred_check_branch
          %298 = sbr.rel (%p296) target = $region28
        $region27: #{tpu_custom_call.1} parent=11 // pred_region
          _
        $region28: #{tpu_custom_call.1} parent=11 // pred_fallthru
          _
        // Predicated region
        $region29: #{tpu_custom_call.1} parent=11 // pred_check
          %p299 = pneg %p203
        $region30: #{tpu_custom_call.1} parent=11 // pred_check_branch
          %301 = sbr.rel (%p299) target = $region32
        $region31: #{tpu_custom_call.1} parent=11 // pred_region
          %303 = vsyncadd [#allocation6], 0
          %s304 = sshll.u32 %s7, 4
          %s305 = int_to_ptr.hbm [resolvable:$true] %s304
          %s306 = sshll.u32 [#allocation7], 4
          %s307 = int_to_ptr.vmem [resolvable:$true] %s306
          %312 = dma.hbm_to_vmem [thread:$0]  %s305, 1024, %s307, [#allocation6], 64, 64, 4
        $region32: #{tpu_custom_call.1} parent=11 // pred_fallthru
          _
        // Predicated region
        $region33: #{tpu_custom_call.1} parent=11 // pred_check
          %p313 = pneg %p224
        $region34: #{tpu_custom_call.1} parent=11 // pred_check_branch
          %315 = sbr.rel (%p313) target = $region36
        $region35: #{tpu_custom_call.1} parent=11 // pred_region
          _
        $region36: #{tpu_custom_call.1} parent=11 // pred_fallthru
          _
      $region12: #{tpu_custom_call.1} parent=5 // pred_fallthru
        _
      %p316 = scmp.lt.s32.totalorder %s20, 2
      // Predicated region
      $region37: #{tpu_custom_call.1} parent=5 // pred_check
        %p317 = pneg %p316
      $region38: #{tpu_custom_call.1} parent=5 // pred_check_branch
        %319 = sbr.rel (%p317) target = $region40
      $region39: #{tpu_custom_call.1} parent=5 // pred_region
        // Predicated region
        $region41: #{tpu_custom_call.1} parent=39 // pred_check
          %p320 = pneg %p40
        $region42: #{tpu_custom_call.1} parent=39 // pred_check_branch
          %322 = sbr.rel (%p320) target = $region44
        $region43: #{tpu_custom_call.1} parent=39 // pred_region
          %p323 = scmp.lt.s32.totalorder %s20, 1
          %s324 = scalar_select %p323, %s20, 1
          %s325 = smul.addr %s324, 16
          %s326 = smul.addr %s325, 4
          %s327 = scalar_lea.vmem %s0, %s326
        $region44: #{tpu_custom_call.1} parent=39 // pred_fallthru
          _
        // Predicated region
        $region45: #{tpu_custom_call.1} parent=39 // pred_check
          %p328 = pneg %p66
        $region46: #{tpu_custom_call.1} parent=39 // pred_check_branch
          %330 = sbr.rel (%p328) target = $region48
        $region47: #{tpu_custom_call.1} parent=39 // pred_region
          %p331 = scmp.lt.s32.totalorder %s20, 1
          %s332 = scalar_select %p331, %s20, 1
          %s333 = smul.addr %s332, 16
          %s334 = smul.addr %s333, 4
          %s335 = scalar_lea.vmem %s1, %s334
        $region48: #{tpu_custom_call.1} parent=39 // pred_fallthru
          _
        // Predicated region
        $region49: #{tpu_custom_call.1} parent=39 // pred_check
          %p336 = pneg %p92
        $region50: #{tpu_custom_call.1} parent=39 // pred_check_branch
          %338 = sbr.rel (%p336) target = $region52
        $region51: #{tpu_custom_call.1} parent=39 // pred_region
          %p339 = scmp.lt.s32.totalorder %s20, 1
          %s340 = scalar_select %p339, %s20, 1
          %s341 = smul.addr %s340, 8
          %s342 = scalar_lea.vmem %s2, %s341
        $region52: #{tpu_custom_call.1} parent=39 // pred_fallthru
          _
      $region40: #{tpu_custom_call.1} parent=5 // pred_fallthru
        _
      %p343 = scmp.le.s32.totalorder 1, %s20
      %p344 = scmp.lt.s32.totalorder %s20, 3
      %p345 = pnand %p343, %p344
      %p346 = pneg %p345
      // Predicated region
      $region53: #{tpu_custom_call.1} parent=5 // pred_check
        _
      $region54: #{tpu_custom_call.1} parent=5 // pred_check_branch
        %348 = sbr.rel (%p345) target = $region56
      $region55: #{tpu_custom_call.1} parent=5 // pred_region
        %s349 = ssub.s32 %s20, 1
        // Predicated region
        $region57: #{tpu_custom_call.1} parent=55 // pred_check
          %p350 = pneg %p119
        $region58: #{tpu_custom_call.1} parent=55 // pred_check_branch
          %352 = sbr.rel (%p350) target = $region60
        $region59: #{tpu_custom_call.1} parent=55 // pred_region
          %354 = dma.done [#allocation3], 128
        $region60: #{tpu_custom_call.1} parent=55 // pred_fallthru
          _
        // Predicated region
        $region61: #{tpu_custom_call.1} parent=55 // pred_check
          %p355 = pneg %p161
        $region62: #{tpu_custom_call.1} parent=55 // pred_check_branch
          %357 = sbr.rel (%p355) target = $region64
        $region63: #{tpu_custom_call.1} parent=55 // pred_region
          %359 = dma.done [#allocation6], 2048
        $region64: #{tpu_custom_call.1} parent=55 // pred_fallthru
          _
        // Predicated region
        $region65: #{tpu_custom_call.1} parent=55 // pred_check
          %p360 = pneg %p203
        $region66: #{tpu_custom_call.1} parent=55 // pred_check_branch
          %362 = sbr.rel (%p360) target = $region68
        $region67: #{tpu_custom_call.1} parent=55 // pred_region
          %364 = dma.done [#allocation6], 1024
        $region68: #{tpu_custom_call.1} parent=55 // pred_fallthru
          _
        %p365 = scmp.lt.s32.totalorder %s25, 1
        %s366 = scalar_select %p365, %s25, 1
        %s367 = smul.addr %s366, 16
        %s368 = smul.addr %s367, 4
        %s369 = scalar_lea.vmem %s0, %s368
        %p370 = pneg %p46
        %p371 = pneg %p43
        %p372 = scmp.lt.s32.totalorder %s25, 1
        %s373 = scalar_select %p372, %s25, 1
        %s374 = smul.addr %s373, 16
        %s375 = smul.addr %s374, 4
        %s376 = scalar_lea.vmem %s1, %s375
        %p377 = pneg %p72
        %p378 = pneg %p69
        %p379 = scmp.lt.s32.totalorder %s25, 1
        %s380 = scalar_select %p379, %s25, 1
        %s381 = smul.addr %s380, 8
        %s382 = scalar_lea.vmem %s2, %s381
        %p383 = pneg %p98
        %p384 = pneg %p95
        %p385 = pneg %p119
        %p386 = pneg %p116
        %p387 = pneg %p140
        %p388 = pneg %p137
        %p389 = pneg %p161
        %p390 = pneg %p158
        %p391 = pneg %p182
        %p392 = pneg %p179
        %p393 = pneg %p203
        %p394 = pneg %p200
        %p395 = pneg %p224
        %p396 = pneg %p221
        %p397 = pneg %p250
        %p398 = pneg %p247
        %s399 = sand.u32 %s237, 1
        %s400 = scalar_lea.sflag [#allocation4], %s399
        %s401 = sand.u32 %s237, 1
        %s402 = smul.addr %s401, 16
        %s403 = scalar_lea.vmem [#allocation8], %s402
        %p404 = scmp.lt.s32.totalorder %s25, 1
        %s405 = scalar_select %p404, %s25, 1
        %s406 = smul.addr %s405, 16
        %s407 = smul.addr %s406, 4
        %s408 = scalar_lea.vmem %s0, %s407
        %p409 = scmp.lt.s32.totalorder %s25, 1
        %s410 = scalar_select %p409, %s25, 1
        %s411 = smul.addr %s410, 16
        %s412 = smul.addr %s411, 4
        %s413 = scalar_lea.vmem %s1, %s412
        %p414 = scmp.lt.s32.totalorder %s25, 1
        %s415 = scalar_select %p414, %s25, 1
        %s416 = smul.addr %s415, 8
        %s417 = scalar_lea.vmem %s2, %s416
        %v419 = vld [vmem:[%s408] sm:$0xf]
        %v420 = vld [vmem:[%s408 + $0x4] sm:$0xf]
        %v421 = vld [vmem:[%s408 + $0x8] sm:$0xf]
        %v422 = vld [vmem:[%s408 + $0xc] sm:$0xf]
        %v423 = vld [vmem:[%s408 + $0x10] sm:$0xf]
        %v424 = vld [vmem:[%s408 + $0x14] sm:$0xf]
        %v425 = vld [vmem:[%s408 + $0x18] sm:$0xf]
        %v426 = vld [vmem:[%s408 + $0x1c] sm:$0xf]
        %v427 = vld [vmem:[%s408 + $0x20] sm:$0xf]
        %v428 = vld [vmem:[%s408 + $0x24] sm:$0xf]
        %v429 = vld [vmem:[%s408 + $0x28] sm:$0xf]
        %v430 = vld [vmem:[%s408 + $0x2c] sm:$0xf]
        %v431 = vld [vmem:[%s408 + $0x30] sm:$0xf]
        %v432 = vld [vmem:[%s408 + $0x34] sm:$0xf]
        %v433 = vld [vmem:[%s408 + $0x38] sm:$0xf]
        %v434 = vld [vmem:[%s408 + $0x3c] sm:$0xf]
        %v435 = vld [vmem:[%s413] sm:$0xf]
        %v436 = vld [vmem:[%s413 + $0x4] sm:$0xf]
        %v437 = vld [vmem:[%s413 + $0x8] sm:$0xf]
        %v438 = vld [vmem:[%s413 + $0xc] sm:$0xf]
        %v439 = vld [vmem:[%s413 + $0x10] sm:$0xf]
        %v440 = vld [vmem:[%s413 + $0x14] sm:$0xf]
        %v441 = vld [vmem:[%s413 + $0x18] sm:$0xf]
        %v442 = vld [vmem:[%s413 + $0x1c] sm:$0xf]
        %v443 = vld [vmem:[%s413 + $0x20] sm:$0xf]
        %v444 = vld [vmem:[%s413 + $0x24] sm:$0xf]
        %v445 = vld [vmem:[%s413 + $0x28] sm:$0xf]
        %v446 = vld [vmem:[%s413 + $0x2c] sm:$0xf]
        %v447 = vld [vmem:[%s413 + $0x30] sm:$0xf]
        %v448 = vld [vmem:[%s413 + $0x34] sm:$0xf]
        %v449 = vld [vmem:[%s413 + $0x38] sm:$0xf]
        %v450 = vld [vmem:[%s413 + $0x3c] sm:$0xf]
        %v451 = vld [vmem:[#allocation2] sm:$0xf]
        %v452 = vld [vmem:[#allocation2 + $0x4] sm:$0xf]
        %v453 = vld [vmem:[%s4] sm:$0x1]
        %v455 = vperm.slane %v453, 0
        %v473 = vunpack.c.l.b16 %v419
        %v474 = vunpack.c.l.b16 %v420
        %v475 = vunpack.c.l.b16 %v421
        %v476 = vunpack.c.l.b16 %v422
        %v477 = vunpack.c.l.b16 %v423
        %v478 = vunpack.c.l.b16 %v424
        %v479 = vunpack.c.l.b16 %v425
        %v480 = vunpack.c.l.b16 %v426
        %v481 = vunpack.c.l.b16 %v427
        %v482 = vunpack.c.l.b16 %v428
        %v483 = vunpack.c.l.b16 %v429
        %v484 = vunpack.c.l.b16 %v430
        %v485 = vunpack.c.l.b16 %v431
        %v486 = vunpack.c.l.b16 %v432
        %v487 = vunpack.c.l.b16 %v433
        %v488 = vunpack.c.l.b16 %v434
        %v489 = vpack.c.b16 %v474, %v473
        %v490 = vpack.c.b16 %v476, %v475
        %v491 = vpack.c.b16 %v478, %v477
        %v492 = vpack.c.b16 %v480, %v479
        %v493 = vpack.c.b16 %v482, %v481
        %v494 = vpack.c.b16 %v484, %v483
        %v495 = vpack.c.b16 %v486, %v485
        %v496 = vpack.c.b16 %v488, %v487
        %v499 = vunpack.c.l.b16 %v451
        %v500 = vunpack.c.l.b16 %v452
        %v501 = vpack.c.b16 %v500, %v499
        %vm503 = vcmask 130048
        %v505 = vsel %vm503, %v489, 0
        %v508 = vsel %vm503, %v490, 0
        %v511 = vsel %vm503, %v491, 0
        %v514 = vsel %vm503, %v492, 0
        %v517 = vsel %vm503, %v493, 0
        %v520 = vsel %vm503, %v494, 0
        %v523 = vsel %vm503, %v495, 0
        %v526 = vsel %vm503, %v496, 0
        %528 = vmatpush.bf16.msra.mxu0 0
        %529 = vmatpush.bf16.msra.mxu0 0
        %530 = vmatpush.bf16.msra.mxu0 0
        %531 = vmatpush.bf16.msra.mxu0 0
        %532 = vmatpush.bf16.msra.mxu0 0
        %533 = vmatpush.bf16.msra.mxu0 0
        %534 = vmatpush.bf16.msra.mxu0 0
        %535 = vmatpush.bf16.msra.mxu0 %v501
        %536 = vmatmul.bf16.gmra.mxu0 %v505
        %v537 = vpop.f32.mrf.mxu0
        %v538 = vadd.f32 %v455, %v537
        %v539 = vpop.f32.mrf.mxu0
        %v540 = vadd.f32 %v455, %v539
        %541 = vmatmul.bf16.gmra.mxu0 %v508
        %v542 = vpop.f32.mrf.mxu0
        %v543 = vadd.f32 %v455, %v542
        %v544 = vpop.f32.mrf.mxu0
        %v545 = vadd.f32 %v455, %v544
        %546 = vmatmul.bf16.gmra.mxu0 %v511
        %v547 = vpop.f32.mrf.mxu0
        %v548 = vadd.f32 %v455, %v547
        %v549 = vpop.f32.mrf.mxu0
        %v550 = vadd.f32 %v455, %v549
        %551 = vmatmul.bf16.gmra.mxu0 %v514
        %v552 = vpop.f32.mrf.mxu0
        %v553 = vadd.f32 %v455, %v552
        %v554 = vpop.f32.mrf.mxu0
        %v555 = vadd.f32 %v455, %v554
        %556 = vmatmul.bf16.gmra.mxu0 %v517
        %v557 = vpop.f32.mrf.mxu0
        %v558 = vadd.f32 %v455, %v557
        %v559 = vpop.f32.mrf.mxu0
        %v560 = vadd.f32 %v455, %v559
        %561 = vmatmul.bf16.gmra.mxu0 %v520
        %v562 = vpop.f32.mrf.mxu0
        %v563 = vadd.f32 %v455, %v562
        %v564 = vpop.f32.mrf.mxu0
        %v565 = vadd.f32 %v455, %v564
        %566 = vmatmul.bf16.gmra.mxu0 %v523
        %v567 = vpop.f32.mrf.mxu0
        %v568 = vadd.f32 %v455, %v567
        %v569 = vpop.f32.mrf.mxu0
        %v570 = vadd.f32 %v455, %v569
        %571 = vmatmul.bf16.gmra.mxu0 %v526
        %v572 = vpop.f32.mrf.mxu0
        %v573 = vadd.f32 %v455, %v572
        %v574 = vpop.f32.mrf.mxu0
        %v575 = vadd.f32 %v455, %v574
        %576 = vdwg.mxu0
        %v577 = vpack.c.bf16 %v540, %v538
        %v578 = vpack.c.bf16 %v545, %v543
        %v579 = vpack.c.bf16 %v550, %v548
        %v580 = vpack.c.bf16 %v555, %v553
        %v581 = vpack.c.bf16 %v560, %v558
        %v582 = vpack.c.bf16 %v565, %v563
        %v583 = vpack.c.bf16 %v570, %v568
        %v584 = vpack.c.bf16 %v575, %v573
        %v601 = vunpack.c.l.b16 %v435
        %v602 = vunpack.c.l.b16 %v436
        %v603 = vunpack.c.l.b16 %v437
        %v604 = vunpack.c.l.b16 %v438
        %v605 = vunpack.c.l.b16 %v439
        %v606 = vunpack.c.l.b16 %v440
        %v607 = vunpack.c.l.b16 %v441
        %v608 = vunpack.c.l.b16 %v442
        %v609 = vunpack.c.l.b16 %v443
        %v610 = vunpack.c.l.b16 %v444
        %v611 = vunpack.c.l.b16 %v445
        %v612 = vunpack.c.l.b16 %v446
        %v613 = vunpack.c.l.b16 %v447
        %v614 = vunpack.c.l.b16 %v448
        %v615 = vunpack.c.l.b16 %v449
        %v616 = vunpack.c.l.b16 %v450
        %v617 = vpack.c.b16 %v602, %v601
        %v618 = vpack.c.b16 %v604, %v603
        %v619 = vpack.c.b16 %v606, %v605
        %v620 = vpack.c.b16 %v608, %v607
        %v621 = vpack.c.b16 %v610, %v609
        %v622 = vpack.c.b16 %v612, %v611
        %v623 = vpack.c.b16 %v614, %v613
        %v624 = vpack.c.b16 %v616, %v615
        %633 = vmatpush.bf16.msra.mxu0 %v584
        %634 = vmatpush.bf16.msra.mxu0 %v583
        %635 = vmatpush.bf16.msra.mxu0 %v582
        %636 = vmatpush.bf16.msra.mxu0 %v581
        %637 = vmatpush.bf16.msra.mxu0 %v580
        %638 = vmatpush.bf16.msra.mxu0 %v579
        %639 = vmatpush.bf16.msra.mxu0 %v578
        %640 = vmatpush.bf16.msra.mxu0 %v577
        %641 = vmatmul.bf16.gmra.mxu0 %v617
        %v642 = vpop.f32.mrf.mxu0
        %v643 = vadd.f32 0.0, %v642
        %v644 = vpop.f32.mrf.mxu0
        %v645 = vadd.f32 0.0, %v644
        %646 = vmatmul.bf16.gmra.mxu0 %v618
        %v647 = vpop.f32.mrf.mxu0
        %v648 = vadd.f32 0.0, %v647
        %v649 = vpop.f32.mrf.mxu0
        %v650 = vadd.f32 0.0, %v649
        %651 = vmatmul.bf16.gmra.mxu0 %v619
        %v652 = vpop.f32.mrf.mxu0
        %v653 = vadd.f32 0.0, %v652
        %v654 = vpop.f32.mrf.mxu0
        %v655 = vadd.f32 0.0, %v654
        %656 = vmatmul.bf16.gmra.mxu0 %v620
        %v657 = vpop.f32.mrf.mxu0
        %v658 = vadd.f32 0.0, %v657
        %v659 = vpop.f32.mrf.mxu0
        %v660 = vadd.f32 0.0, %v659
        %661 = vmatmul.bf16.gmra.mxu0 %v621
        %v662 = vpop.f32.mrf.mxu0
        %v663 = vadd.f32 0.0, %v662
        %v664 = vpop.f32.mrf.mxu0
        %v665 = vadd.f32 0.0, %v664
        %666 = vmatmul.bf16.gmra.mxu0 %v622
        %v667 = vpop.f32.mrf.mxu0
        %v668 = vadd.f32 0.0, %v667
        %v669 = vpop.f32.mrf.mxu0
        %v670 = vadd.f32 0.0, %v669
        %671 = vmatmul.bf16.gmra.mxu0 %v623
        %v672 = vpop.f32.mrf.mxu0
        %v673 = vadd.f32 0.0, %v672
        %v674 = vpop.f32.mrf.mxu0
        %v675 = vadd.f32 0.0, %v674
        %676 = vmatmul.bf16.gmra.mxu0 %v624
        %v677 = vpop.f32.mrf.mxu0
        %v678 = vadd.f32 0.0, %v677
        %v679 = vpop.f32.mrf.mxu0
        %v680 = vadd.f32 0.0, %v679
        %681 = vdwg.mxu0
        %v682 = vpack.c.bf16 %v645, %v643
        %v683 = vpack.c.bf16 %v650, %v648
        %v684 = vpack.c.bf16 %v655, %v653
        %v685 = vpack.c.bf16 %v660, %v658
        %v686 = vpack.c.bf16 %v665, %v663
        %v687 = vpack.c.bf16 %v670, %v668
        %v688 = vpack.c.bf16 %v675, %v673
        %v689 = vpack.c.bf16 %v680, %v678
        %v690 = vld [vmem:[#allocation5] sm:$0xf]
        %v691 = vld [vmem:[#allocation5 + $0x4] sm:$0xf]
        %v692 = vld [vmem:[#allocation5 + $0x8] sm:$0xf]
        %v693 = vld [vmem:[#allocation5 + $0xc] sm:$0xf]
        %v694 = vld [vmem:[#allocation5 + $0x10] sm:$0xf]
        %v695 = vld [vmem:[#allocation5 + $0x14] sm:$0xf]
        %v696 = vld [vmem:[#allocation5 + $0x18] sm:$0xf]
        %v697 = vld [vmem:[#allocation5 + $0x1c] sm:$0xf]
        %v698 = vld [vmem:[#allocation5 + $0x20] sm:$0xf]
        %v699 = vld [vmem:[#allocation5 + $0x24] sm:$0xf]
        %v700 = vld [vmem:[#allocation5 + $0x28] sm:$0xf]
        %v701 = vld [vmem:[#allocation5 + $0x2c] sm:$0xf]
        %v702 = vld [vmem:[#allocation5 + $0x30] sm:$0xf]
        %v703 = vld [vmem:[#allocation5 + $0x34] sm:$0xf]
        %v704 = vld [vmem:[#allocation5 + $0x38] sm:$0xf]
        %v705 = vld [vmem:[#allocation5 + $0x3c] sm:$0xf]
        %v706 = vld [vmem:[%s6] sm:$0x1]
        %v707 = vperm.slane %v706, 0
        %v724 = vunpack.c.l.b16 %v690
        %v725 = vunpack.c.l.b16 %v691
        %v726 = vunpack.c.l.b16 %v692
        %v727 = vunpack.c.l.b16 %v693
        %v728 = vunpack.c.l.b16 %v694
        %v729 = vunpack.c.l.b16 %v695
        %v730 = vunpack.c.l.b16 %v696
        %v731 = vunpack.c.l.b16 %v697
        %v732 = vunpack.c.l.b16 %v698
        %v733 = vunpack.c.l.b16 %v699
        %v734 = vunpack.c.l.b16 %v700
        %v735 = vunpack.c.l.b16 %v701
        %v736 = vunpack.c.l.b16 %v702
        %v737 = vunpack.c.l.b16 %v703
        %v738 = vunpack.c.l.b16 %v704
        %v739 = vunpack.c.l.b16 %v705
        %v740 = vpack.c.b16 %v725, %v724
        %v741 = vpack.c.b16 %v727, %v726
        %v742 = vpack.c.b16 %v729, %v728
        %v743 = vpack.c.b16 %v731, %v730
        %v744 = vpack.c.b16 %v733, %v732
        %v745 = vpack.c.b16 %v735, %v734
        %v746 = vpack.c.b16 %v737, %v736
        %v747 = vpack.c.b16 %v739, %v738
        %756 = vmatpush.bf16.msra.mxu0 %v747
        %757 = vmatpush.bf16.msra.mxu0 %v746
        %758 = vmatpush.bf16.msra.mxu0 %v745
        %759 = vmatpush.bf16.msra.mxu0 %v744
        %760 = vmatpush.bf16.msra.mxu0 %v743
        %761 = vmatpush.bf16.msra.mxu0 %v742
        %762 = vmatpush.bf16.msra.mxu0 %v741
        %763 = vmatpush.bf16.msra.mxu0 %v740
        %764 = vmatmul.bf16.gmra.mxu0 %v682
        %v765 = vpop.f32.mrf.mxu0
        %v766 = vadd.f32 %v707, %v765
        %v767 = vpop.f32.mrf.mxu0
        %v768 = vadd.f32 %v707, %v767
        %769 = vmatmul.bf16.gmra.mxu0 %v683
        %v770 = vpop.f32.mrf.mxu0
        %v771 = vadd.f32 %v707, %v770
        %v772 = vpop.f32.mrf.mxu0
        %v773 = vadd.f32 %v707, %v772
        %774 = vmatmul.bf16.gmra.mxu0 %v684
        %v775 = vpop.f32.mrf.mxu0
        %v776 = vadd.f32 %v707, %v775
        %v777 = vpop.f32.mrf.mxu0
        %v778 = vadd.f32 %v707, %v777
        %779 = vmatmul.bf16.gmra.mxu0 %v685
        %v780 = vpop.f32.mrf.mxu0
        %v781 = vadd.f32 %v707, %v780
        %v782 = vpop.f32.mrf.mxu0
        %v783 = vadd.f32 %v707, %v782
        %784 = vmatmul.bf16.gmra.mxu0 %v686
        %v785 = vpop.f32.mrf.mxu0
        %v786 = vadd.f32 %v707, %v785
        %v787 = vpop.f32.mrf.mxu0
        %v788 = vadd.f32 %v707, %v787
        %789 = vmatmul.bf16.gmra.mxu0 %v687
        %v790 = vpop.f32.mrf.mxu0
        %v791 = vadd.f32 %v707, %v790
        %v792 = vpop.f32.mrf.mxu0
        %v793 = vadd.f32 %v707, %v792
        %794 = vmatmul.bf16.gmra.mxu0 %v688
        %v795 = vpop.f32.mrf.mxu0
        %v796 = vadd.f32 %v707, %v795
        %v797 = vpop.f32.mrf.mxu0
        %v798 = vadd.f32 %v707, %v797
        %799 = vmatmul.bf16.gmra.mxu0 %v689
        %v800 = vpop.f32.mrf.mxu0
        %v801 = vadd.f32 %v707, %v800
        %v802 = vpop.f32.mrf.mxu0
        %v803 = vadd.f32 %v707, %v802
        %804 = vdwg.mxu0
        %v805 = vmax.f32 %v766, 0.0
        %v806 = vmax.f32 %v768, 0.0
        %v807 = vmax.f32 %v771, 0.0
        %v808 = vmax.f32 %v773, 0.0
        %v809 = vmax.f32 %v776, 0.0
        %v810 = vmax.f32 %v778, 0.0
        %v811 = vmax.f32 %v781, 0.0
        %v812 = vmax.f32 %v783, 0.0
        %v813 = vmax.f32 %v786, 0.0
        %v814 = vmax.f32 %v788, 0.0
        %v815 = vmax.f32 %v791, 0.0
        %v816 = vmax.f32 %v793, 0.0
        %v817 = vmax.f32 %v796, 0.0
        %v818 = vmax.f32 %v798, 0.0
        %v819 = vmax.f32 %v801, 0.0
        %v820 = vmax.f32 %v803, 0.0
        %v821 = vpack.c.bf16 %v806, %v805
        %v822 = vpack.c.bf16 %v808, %v807
        %v823 = vpack.c.bf16 %v810, %v809
        %v824 = vpack.c.bf16 %v812, %v811
        %v825 = vpack.c.bf16 %v814, %v813
        %v826 = vpack.c.bf16 %v816, %v815
        %v827 = vpack.c.bf16 %v818, %v817
        %v828 = vpack.c.bf16 %v820, %v819
        %829 = vmatpush.bf16.msra.mxu0 %v828
        %830 = vmatpush.bf16.msra.mxu0 %v827
        %831 = vmatpush.bf16.msra.mxu0 %v826
        %832 = vmatpush.bf16.msra.mxu0 %v825
        %833 = vmatpush.bf16.msra.mxu0 %v824
        %834 = vmatpush.bf16.msra.mxu0 %v823
        %835 = vmatpush.bf16.msra.mxu0 %v822
        %836 = vmatpush.bf16.msra.mxu0 %v821
        %837 = vmatmul.bf16.gmra.mxu0 %v617
        %v838 = vpop.f32.mrf.mxu0
        %v839 = vadd.f32 0.0, %v838
        %v840 = vpop.f32.mrf.mxu0
        %v841 = vadd.f32 0.0, %v840
        %842 = vmatmul.bf16.gmra.mxu0 %v618
        %v843 = vpop.f32.mrf.mxu0
        %v844 = vadd.f32 0.0, %v843
        %v845 = vpop.f32.mrf.mxu0
        %v846 = vadd.f32 0.0, %v845
        %847 = vmatmul.bf16.gmra.mxu0 %v619
        %v848 = vpop.f32.mrf.mxu0
        %v849 = vadd.f32 0.0, %v848
        %v850 = vpop.f32.mrf.mxu0
        %v851 = vadd.f32 0.0, %v850
        %852 = vmatmul.bf16.gmra.mxu0 %v620
        %v853 = vpop.f32.mrf.mxu0
        %v854 = vadd.f32 0.0, %v853
        %v855 = vpop.f32.mrf.mxu0
        %v856 = vadd.f32 0.0, %v855
        %857 = vmatmul.bf16.gmra.mxu0 %v621
        %v858 = vpop.f32.mrf.mxu0
        %v859 = vadd.f32 0.0, %v858
        %v860 = vpop.f32.mrf.mxu0
        %v861 = vadd.f32 0.0, %v860
        %862 = vmatmul.bf16.gmra.mxu0 %v622
        %v863 = vpop.f32.mrf.mxu0
        %v864 = vadd.f32 0.0, %v863
        %v865 = vpop.f32.mrf.mxu0
        %v866 = vadd.f32 0.0, %v865
        %867 = vmatmul.bf16.gmra.mxu0 %v623
        %v868 = vpop.f32.mrf.mxu0
        %v869 = vadd.f32 0.0, %v868
        %v870 = vpop.f32.mrf.mxu0
        %v871 = vadd.f32 0.0, %v870
        %872 = vmatmul.bf16.gmra.mxu0 %v624
        %v873 = vpop.f32.mrf.mxu0
        %v874 = vadd.f32 0.0, %v873
        %v875 = vpop.f32.mrf.mxu0
        %v876 = vadd.f32 0.0, %v875
        %877 = vdwg.mxu0
        %v878 = vpack.c.bf16 %v841, %v839
        %v879 = vpack.c.bf16 %v846, %v844
        %v880 = vpack.c.bf16 %v851, %v849
        %v881 = vpack.c.bf16 %v856, %v854
        %v882 = vpack.c.bf16 %v861, %v859
        %v883 = vpack.c.bf16 %v866, %v864
        %v884 = vpack.c.bf16 %v871, %v869
        %v885 = vpack.c.bf16 %v876, %v874
        %s886 = scalar_lea.vmem [#allocation5], 64
        %v887 = vld [vmem:[%s886] sm:$0xf]
        %v888 = vld [vmem:[%s886 + $0x4] sm:$0xf]
        %v889 = vld [vmem:[%s886 + $0x8] sm:$0xf]
        %v890 = vld [vmem:[%s886 + $0xc] sm:$0xf]
        %v891 = vld [vmem:[%s886 + $0x10] sm:$0xf]
        %v892 = vld [vmem:[%s886 + $0x14] sm:$0xf]
        %v893 = vld [vmem:[%s886 + $0x18] sm:$0xf]
        %v894 = vld [vmem:[%s886 + $0x1c] sm:$0xf]
        %v895 = vld [vmem:[%s886 + $0x20] sm:$0xf]
        %v896 = vld [vmem:[%s886 + $0x24] sm:$0xf]
        %v897 = vld [vmem:[%s886 + $0x28] sm:$0xf]
        %v898 = vld [vmem:[%s886 + $0x2c] sm:$0xf]
        %v899 = vld [vmem:[%s886 + $0x30] sm:$0xf]
        %v900 = vld [vmem:[%s886 + $0x34] sm:$0xf]
        %v901 = vld [vmem:[%s886 + $0x38] sm:$0xf]
        %v902 = vld [vmem:[%s886 + $0x3c] sm:$0xf]
        %v903 = vld [vmem:[%s6 + $0x1] sm:$0x1]
        %v904 = vperm.slane %v903, 0
        %v921 = vunpack.c.l.b16 %v887
        %v922 = vunpack.c.l.b16 %v888
        %v923 = vunpack.c.l.b16 %v889
        %v924 = vunpack.c.l.b16 %v890
        %v925 = vunpack.c.l.b16 %v891
        %v926 = vunpack.c.l.b16 %v892
        %v927 = vunpack.c.l.b16 %v893
        %v928 = vunpack.c.l.b16 %v894
        %v929 = vunpack.c.l.b16 %v895
        %v930 = vunpack.c.l.b16 %v896
        %v931 = vunpack.c.l.b16 %v897
        %v932 = vunpack.c.l.b16 %v898
        %v933 = vunpack.c.l.b16 %v899
        %v934 = vunpack.c.l.b16 %v900
        %v935 = vunpack.c.l.b16 %v901
        %v936 = vunpack.c.l.b16 %v902
        %v937 = vpack.c.b16 %v922, %v921
        %v938 = vpack.c.b16 %v924, %v923
        %v939 = vpack.c.b16 %v926, %v925
        %v940 = vpack.c.b16 %v928, %v927
        %v941 = vpack.c.b16 %v930, %v929
        %v942 = vpack.c.b16 %v932, %v931
        %v943 = vpack.c.b16 %v934, %v933
        %v944 = vpack.c.b16 %v936, %v935
        %953 = vmatpush.bf16.msra.mxu0 %v944
        %954 = vmatpush.bf16.msra.mxu0 %v943
        %955 = vmatpush.bf16.msra.mxu0 %v942
        %956 = vmatpush.bf16.msra.mxu0 %v941
        %957 = vmatpush.bf16.msra.mxu0 %v940
        %958 = vmatpush.bf16.msra.mxu0 %v939
        %959 = vmatpush.bf16.msra.mxu0 %v938
        %960 = vmatpush.bf16.msra.mxu0 %v937
        %961 = vmatmul.bf16.gmra.mxu0 %v878
        %v962 = vpop.f32.mrf.mxu0
        %v963 = vadd.f32 %v904, %v962
        %v964 = vpop.f32.mrf.mxu0
        %v965 = vadd.f32 %v904, %v964
        %966 = vmatmul.bf16.gmra.mxu0 %v879
        %v967 = vpop.f32.mrf.mxu0
        %v968 = vadd.f32 %v904, %v967
        %v969 = vpop.f32.mrf.mxu0
        %v970 = vadd.f32 %v904, %v969
        %971 = vmatmul.bf16.gmra.mxu0 %v880
        %v972 = vpop.f32.mrf.mxu0
        %v973 = vadd.f32 %v904, %v972
        %v974 = vpop.f32.mrf.mxu0
        %v975 = vadd.f32 %v904, %v974
        %976 = vmatmul.bf16.gmra.mxu0 %v881
        %v977 = vpop.f32.mrf.mxu0
        %v978 = vadd.f32 %v904, %v977
        %v979 = vpop.f32.mrf.mxu0
        %v980 = vadd.f32 %v904, %v979
        %981 = vmatmul.bf16.gmra.mxu0 %v882
        %v982 = vpop.f32.mrf.mxu0
        %v983 = vadd.f32 %v904, %v982
        %v984 = vpop.f32.mrf.mxu0
        %v985 = vadd.f32 %v904, %v984
        %986 = vmatmul.bf16.gmra.mxu0 %v883
        %v987 = vpop.f32.mrf.mxu0
        %v988 = vadd.f32 %v904, %v987
        %v989 = vpop.f32.mrf.mxu0
        %v990 = vadd.f32 %v904, %v989
        %991 = vmatmul.bf16.gmra.mxu0 %v884
        %v992 = vpop.f32.mrf.mxu0
        %v993 = vadd.f32 %v904, %v992
        %v994 = vpop.f32.mrf.mxu0
        %v995 = vadd.f32 %v904, %v994
        %996 = vmatmul.bf16.gmra.mxu0 %v885
        %v997 = vpop.f32.mrf.mxu0
        %v998 = vadd.f32 %v904, %v997
        %v999 = vpop.f32.mrf.mxu0
        %v1000 = vadd.f32 %v904, %v999
        %1001 = vdwg.mxu0
        %v1002 = vld [vmem:[%s417] sm:$0xff]
        %1003 = vmatpush.msra.mxu0 %v1000
        %1004 = vmatpush.msra.mxu0 %v998
        %1005 = vmatpush.msra.mxu0 %v995
        %1006 = vmatpush.msra.mxu0 %v993
        %1007 = vmatpush.msra.mxu0 %v990
        %1008 = vmatpush.msra.mxu0 %v988
        %1009 = vmatpush.msra.mxu0 %v985
        %1010 = vmatpush.msra.mxu0 %v983
        %1011 = vmatpush.msra.mxu0 %v980
        %1012 = vmatpush.msra.mxu0 %v978
        %1013 = vmatpush.msra.mxu0 %v975
        %1014 = vmatpush.msra.mxu0 %v973
        %1015 = vmatpush.msra.mxu0 %v970
        %1016 = vmatpush.msra.mxu0 %v968
        %1017 = vmatpush.msra.mxu0 %v965
        %1018 = vmatpush.msra.mxu0 %v963
        %1019 = vmatmul.f32.gmra.mxu0 %v1002
        %v1020 = vpop.f32.mrf.mxu0
        %v1021 = vadd.f32 0.0, %v1020
        %1022 = vdwg.mxu0
        %v1023 = vpack.c.bf16 %v1021, %v1021
        %v1024 = vld [vmem:[#allocation7] sm:$0xf]
        %v1025 = vld [vmem:[#allocation7 + $0x4] sm:$0xf]
        %v1026 = vld [vmem:[#allocation7 + $0x8] sm:$0xf]
        %v1027 = vld [vmem:[#allocation7 + $0xc] sm:$0xf]
        %v1028 = vld [vmem:[#allocation7 + $0x10] sm:$0xf]
        %v1029 = vld [vmem:[#allocation7 + $0x14] sm:$0xf]
        %v1030 = vld [vmem:[#allocation7 + $0x18] sm:$0xf]
        %v1031 = vld [vmem:[#allocation7 + $0x1c] sm:$0xf]
        %v1032 = vld [vmem:[#allocation7 + $0x20] sm:$0xf]
        %v1033 = vld [vmem:[#allocation7 + $0x24] sm:$0xf]
        %v1034 = vld [vmem:[#allocation7 + $0x28] sm:$0xf]
        %v1035 = vld [vmem:[#allocation7 + $0x2c] sm:$0xf]
        %v1036 = vld [vmem:[#allocation7 + $0x30] sm:$0xf]
        %v1037 = vld [vmem:[#allocation7 + $0x34] sm:$0xf]
        %v1038 = vld [vmem:[#allocation7 + $0x38] sm:$0xf]
        %v1039 = vld [vmem:[#allocation7 + $0x3c] sm:$0xf]
        %v1040 = vld [vmem:[%s8] sm:$0x1]
        %v1042 = vperm.slane %v1040, 0
        %v1060 = vunpack.c.l.b16 %v1024
        %v1061 = vunpack.c.l.b16 %v1025
        %v1062 = vunpack.c.l.b16 %v1026
        %v1063 = vunpack.c.l.b16 %v1027
        %v1064 = vunpack.c.l.b16 %v1028
        %v1065 = vunpack.c.l.b16 %v1029
        %v1066 = vunpack.c.l.b16 %v1030
        %v1067 = vunpack.c.l.b16 %v1031
        %v1068 = vunpack.c.l.b16 %v1032
        %v1069 = vunpack.c.l.b16 %v1033
        %v1070 = vunpack.c.l.b16 %v1034
        %v1071 = vunpack.c.l.b16 %v1035
        %v1072 = vunpack.c.l.b16 %v1036
        %v1073 = vunpack.c.l.b16 %v1037
        %v1074 = vunpack.c.l.b16 %v1038
        %v1075 = vunpack.c.l.b16 %v1039
        %v1076 = vpack.c.b16 %v1061, %v1060
        %v1077 = vpack.c.b16 %v1063, %v1062
        %v1078 = vpack.c.b16 %v1065, %v1064
        %v1079 = vpack.c.b16 %v1067, %v1066
        %v1080 = vpack.c.b16 %v1069, %v1068
        %v1081 = vpack.c.b16 %v1071, %v1070
        %v1082 = vpack.c.b16 %v1073, %v1072
        %v1083 = vpack.c.b16 %v1075, %v1074
        %1092 = vmatpush.bf16.msra.mxu0 %v1083
        %1093 = vmatpush.bf16.msra.mxu0 %v1082
        %1094 = vmatpush.bf16.msra.mxu0 %v1081
        %1095 = vmatpush.bf16.msra.mxu0 %v1080
        %1096 = vmatpush.bf16.msra.mxu0 %v1079
        %1097 = vmatpush.bf16.msra.mxu0 %v1078
        %1098 = vmatpush.bf16.msra.mxu0 %v1077
        %1099 = vmatpush.bf16.msra.mxu0 %v1076
        %1100 = vmatmul.bf16.gmra.mxu0 %v1023
        %v1101 = vpop.f32.mrf.mxu0
        %v1102 = vadd.f32 %v1042, %v1101
        %v1103 = vpop.f32.mrf.mxu0
        %1104 = vdwg.mxu0
        %1105 = vst [vmem:[%s403] sm:$0xff] %v1021
        %1106 = vst [vmem:[%s403 + $0x8] sm:$0xff] %v1102
        %s1107 = sand.u32 %s237, 1
        %s1108 = scalar_lea.sflag [#allocation4], %s1107
        %s1109 = sand.u32 %s237, 1
        %s1110 = smul.addr %s1109, 16
        %s1111 = scalar_lea.vmem [#allocation8], %s1110
        // Predicated region
        $region69: #{tpu_custom_call.1} parent=55 // pred_check
          %p1112 = pneg %p247
        $region70: #{tpu_custom_call.1} parent=55 // pred_check_branch
          %1114 = sbr.rel (%p1112) target = $region72
        $region71: #{tpu_custom_call.1} parent=55 // pred_region
          %1116 = vsyncadd %s1108, 0
          %s1117 = smul.addr %s25, 2
          %s1118 = smul.addr %s1117, 8
          %s1119 = scalar_lea.hbm %s9, %s1118
          %s1121 = sshll.u32 %s1111, 4
          %s1122 = int_to_ptr.vmem [resolvable:$true] %s1121
          %s1123 = sshll.u32 %s1119, 4
          %s1124 = int_to_ptr.hbm [resolvable:$true] %s1123
          %1126 = dma.vmem_to_hbm [thread:$0]  %s1122, 256, %s1124, %s1108
        $region72: #{tpu_custom_call.1} parent=55 // pred_fallthru
          _
      $region56: #{tpu_custom_call.1} parent=5 // pred_fallthru
        _
      %p1127 = scmp.le.s32.totalorder 2, %s20
      // Predicated region
      $region73: #{tpu_custom_call.1} parent=5 // pred_check
        %p1128 = pneg %p1127
      $region74: #{tpu_custom_call.1} parent=5 // pred_check_branch
        %1130 = sbr.rel (%p1128) target = $region76
      $region75: #{tpu_custom_call.1} parent=5 // pred_region
        %s1131 = ssub.s32 %s20, 2
        // Predicated region
        $region77: #{tpu_custom_call.1} parent=75 // pred_check
          %p1132 = pneg %p253
        $region78: #{tpu_custom_call.1} parent=75 // pred_check_branch
          %1134 = sbr.rel (%p1132) target = $region80
        $region79: #{tpu_custom_call.1} parent=75 // pred_region
          %s1135 = sand.u32 %s238, 1
          %s1136 = scalar_lea.sflag [#allocation4], %s1135
          %s1137 = sand.u32 %s238, 1
          %s1138 = smul.addr %s1137, 16
          %s1139 = scalar_lea.vmem [#allocation8], %s1138
          %1141 = dma.done %s1136, 256
        $region80: #{tpu_custom_call.1} parent=75 // pred_fallthru
          _
      $region76: #{tpu_custom_call.1} parent=5 // pred_fallthru
        _
    $region6: #{tpu_custom_call.1} parent=1 // loop_footer
      %s24 = sadd.s32 1, %s20
    $region7: #{tpu_custom_call.1} parent=1 // loop_footer_branch
      %19 = sbr.rel target = $region3
    $region8: #{tpu_custom_call.1} parent=1 // loop_exit
      _
    %1142 = vsyncpa [#allocation3], 1
    %s1143 = scalar_lea.sflag [#allocation3], 1
    %1144 = vsyncpa %s1143, 1
    %1145 = vsyncpa [#allocation6], 1
    %1146 = vsyncpa [#allocation4], 1
    %s1147 = scalar_lea.sflag [#allocation4], 1
    %1148 = vsyncpa %s1147, 1

</llo_original>
